<compile_context>
chip_gen: v7x
topology: tpu7x:2x2x1
jax: 0.10.0
libtpu: 0.0.40
codegen_flags: <defaults>
</compile_context>

<pallas_src>
import jax
import jax.numpy as jnp
from jax.experimental import pallas as pl
from jax.experimental.pallas import tpu as pltpu


_LANE = 128      # vreg lane width
_SMALL_K = 4     # for K <= this, do the matmul as VPU outer products (skip the MXU)


def _round_up(n, m):
    return ((n + m - 1) // m) * m


def _make_fcnet_kernel(n_layers):
    """Kernel closing over the (static) number of linear layers."""

    def kernel(x_ref, *refs):
        # refs = (w0, b0, w1, b1, ..., w_{L-1}, b_{L-1}, out_ref)
        out_ref = refs[-1]
        h = x_ref[...]                          # (in_dim, TB)  lane-dense
        for i in range(n_layers):
            w = refs[2 * i][...]                # (out_i, in_i) torch layout
            b = refs[2 * i + 1][...]            # (out_i, 1)    broadcasts over lanes
            k = w.shape[1]
            if k <= _SMALL_K:
                # Tiny contraction dim: VPU multiply-add outer products.
                acc = w[:, 0:1] * h[0:1, :] + b
                for kk in range(1, k):
                    acc = acc + w[:, kk:kk + 1] * h[kk:kk + 1, :]
                h = acc
            else:
                h = jnp.dot(w, h, preferred_element_type=jnp.float32) + b
            if i < n_layers - 1:
                h = jnp.tanh(h)                 # EUP elementwise
        out_ref[...] = h.astype(out_ref.dtype)

    return kernel


def fcnet_forward(x, params, *, tb=512):
    """MLP forward pass in a single batch-tiled Pallas call.

    x:      (B, width[0])
    params: list of (W, b) with W: (width[i+1], width[i]) (torch layout),
            b: (width[i+1], 1)
    returns (B, width[-1]) float32
    """
    n_layers = len(params)
    B, in_dim = x.shape
    out_dim = params[-1][0].shape[0]

    # Batch tile: lane-aligned, no bigger than the (padded) batch itself.
    tb = max(_LANE, _round_up(min(tb, _round_up(B, _LANE)), _LANE))
    pad_b = _round_up(B, tb)

    # Batch on the lane axis, zero-padded to a whole number of tiles.
    xt = jnp.zeros((in_dim, pad_b), jnp.float32).at[:, :B].set(
        x.astype(jnp.float32).T)

    flat_params = []
    in_specs = [pl.BlockSpec((in_dim, tb), lambda i: (0, i))]
    for (w, b) in params:
        w = w.astype(jnp.float32)
        b = b.astype(jnp.float32).reshape(w.shape[0], 1)
        flat_params.extend([w, b])
        # Whole-array blocks with a constant index_map -> VMEM-resident weights.
        in_specs.append(pl.BlockSpec(w.shape, lambda i: (0, 0)))
        in_specs.append(pl.BlockSpec(b.shape, lambda i: (0, 0)))

    flops = 2 * pad_b * sum(w.shape[0] * w.shape[1] for w, _ in params)
    transc = pad_b * sum(w.shape[0] for w, _ in params[:-1])
    bytes_accessed = 4 * (in_dim * pad_b + out_dim * pad_b
                          + sum(w.size + b.size for w, b in params))

    out_t = pl.pallas_call(
        _make_fcnet_kernel(n_layers),
        out_shape=jax.ShapeDtypeStruct((out_dim, pad_b), jnp.float32),
        grid_spec=pltpu.PrefetchScalarGridSpec(
            num_scalar_prefetch=0,
            grid=(pad_b // tb,),
            in_specs=in_specs,
            out_specs=pl.BlockSpec((out_dim, tb), lambda i: (0, i)),
        ),
        compiler_params=pltpu.CompilerParams(
            dimension_semantics=("parallel",)),
        cost_estimate=pl.CostEstimate(
            flops=flops, transcendentals=transc, bytes_accessed=bytes_accessed),
    )(xt, *flat_params)

    # (out_dim, pad_B) -> (B, out_dim)
    return out_t[:, :B].T


def init_params(key, width):
    """Deterministic init mimicking torch.nn.Linear default:
    U(-1/sqrt(fan_in), 1/sqrt(fan_in)). W in torch (out, in) layout, b (out, 1)."""
    params = []
    for i in range(len(width) - 1):
        fan_in, fan_out = width[i], width[i + 1]
        key, kw, kb = jax.random.split(key, 3)
        bound = 1.0 / jnp.sqrt(jnp.float32(fan_in))
        w = jax.random.uniform(kw, (fan_out, fan_in), jnp.float32, -bound, bound)
        b = jax.random.uniform(kb, (fan_out, 1), jnp.float32, -bound, bound)
        params.append((w, b))
    return params


def fcnet_reference(x, params):
    """Pure-JAX reference (same math as torch: x @ W.T + b)."""
    h = x.astype(jnp.float32)
    for i, (w, b) in enumerate(params):
        h = h @ w.T + b.T
        if i < len(params) - 1:
            h = jnp.tanh(h)
    return h


if __name__ == "__main__":
    # Inverted-pendulum CBF net: state dim 2 -> hidden 32 -> hidden 32 -> scalar barrier.
    width = [2, 32, 32, 1]
    params = init_params(jax.random.PRNGKey(0), width)

    key = jax.random.PRNGKey(0)
    key, k1, k2 = jax.random.split(key, 3)

    # Small batch (module-typical): single tile, exercises padding.
    batch = 8
    x = jax.random.normal(k1, (batch, width[0]), jnp.float32)
    out = jax.block_until_ready(fcnet_forward(x, params))
    ref = fcnet_reference(x, params)
    assert out.shape == (batch, width[-1])
    assert jnp.allclose(out, ref, atol=1e-5, rtol=1e-4), (out, ref)

    # Larger ragged batch: exercises grid > 1 and the partial-tile padding path.
    batch2 = 300
    x2 = jax.random.normal(k2, (batch2, width[0]), jnp.float32)
    out2 = jax.block_until_ready(fcnet_forward(x2, params, tb=128))
    ref2 = fcnet_reference(x2, params)
    assert out2.shape == (batch2, width[-1])
    assert jnp.allclose(out2, ref2, atol=1e-5, rtol=1e-4), (out2, ref2)

    print("KERNEL_OK")
</pallas_src>

<mosaic_0001>
module attributes {stable_mosaic.version = 11 : i64} {
  func.func @kernel(%arg0: i32, %arg1: memref<2x128xf32, #tpu.memory_space<vmem>>, %arg2: memref<32x2xf32, #tpu.memory_space<vmem>>, %arg3: memref<32x1xf32, #tpu.memory_space<vmem>>, %arg4: memref<32x32xf32, #tpu.memory_space<vmem>>, %arg5: memref<32x1xf32, #tpu.memory_space<vmem>>, %arg6: memref<1x32xf32, #tpu.memory_space<vmem>>, %arg7: memref<1x1xf32, #tpu.memory_space<vmem>>, %arg8: memref<1x128xf32, #tpu.memory_space<vmem>>) attributes {dimension_semantics = [#tpu.dimension_semantics<parallel>], iteration_bounds = array<i64: 1>, scalar_prefetch = 0 : i64, scratch_operands = 0 : i64, tpu.core_type = #tpu.core_type<tc>, window_params = [{transform_indices = @transform_0, window_bounds = array<i64: 2, 128>}, {pipeline_mode = #tpu.pipeline_mode<synchronous>, transform_indices = @transform_1, window_bounds = array<i64: 32, 2>}, {pipeline_mode = #tpu.pipeline_mode<synchronous>, transform_indices = @transform_2, window_bounds = array<i64: 32, 1>}, {pipeline_mode = #tpu.pipeline_mode<synchronous>, transform_indices = @transform_3, window_bounds = array<i64: 32, 32>}, {pipeline_mode = #tpu.pipeline_mode<synchronous>, transform_indices = @transform_4, window_bounds = array<i64: 32, 1>}, {pipeline_mode = #tpu.pipeline_mode<synchronous>, transform_indices = @transform_5, window_bounds = array<i64: 1, 32>}, {pipeline_mode = #tpu.pipeline_mode<synchronous>, transform_indices = @transform_6, window_bounds = array<i64: 1, 1>}, {transform_indices = @transform_7, window_bounds = array<i64: 1, 128>}]} {
    %c0 = arith.constant 0 : index
    %c0_0 = arith.constant 0 : index
    %0 = vector.load %arg1[%c0, %c0_0] : memref<2x128xf32, #tpu.memory_space<vmem>>, vector<2x128xf32>
    %c0_1 = arith.constant 0 : index
    %c0_2 = arith.constant 0 : index
    %1 = vector.load %arg2[%c0_1, %c0_2] : memref<32x2xf32, #tpu.memory_space<vmem>>, vector<32x2xf32>
    %c0_3 = arith.constant 0 : index
    %c0_4 = arith.constant 0 : index
    %2 = vector.load %arg3[%c0_3, %c0_4] : memref<32x1xf32, #tpu.memory_space<vmem>>, vector<32x1xf32>
    %3 = vector.extract_strided_slice %1 {offsets = [0, 0], sizes = [32, 1], strides = [1, 1]} : vector<32x2xf32> to vector<32x1xf32>
    %4 = vector.extract_strided_slice %0 {offsets = [0, 0], sizes = [1, 128], strides = [1, 1]} : vector<2x128xf32> to vector<1x128xf32>
    %5 = vector.broadcast %3 : vector<32x1xf32> to vector<32x128xf32>
    %6 = vector.broadcast %4 : vector<1x128xf32> to vector<32x128xf32>
    %7 = arith.mulf %5, %6 : vector<32x128xf32>
    %8 = vector.broadcast %2 : vector<32x1xf32> to vector<32x128xf32>
    %9 = arith.addf %7, %8 : vector<32x128xf32>
    %10 = vector.extract_strided_slice %1 {offsets = [0, 1], sizes = [32, 1], strides = [1, 1]} : vector<32x2xf32> to vector<32x1xf32>
    %11 = vector.extract_strided_slice %0 {offsets = [1, 0], sizes = [1, 128], strides = [1, 1]} : vector<2x128xf32> to vector<1x128xf32>
    %12 = vector.broadcast %10 : vector<32x1xf32> to vector<32x128xf32>
    %13 = vector.broadcast %11 : vector<1x128xf32> to vector<32x128xf32>
    %14 = arith.mulf %12, %13 : vector<32x128xf32>
    %15 = arith.addf %9, %14 : vector<32x128xf32>
    %16 = math.tanh %15 : vector<32x128xf32>
    %c0_5 = arith.constant 0 : index
    %c0_6 = arith.constant 0 : index
    %17 = vector.load %arg4[%c0_5, %c0_6] : memref<32x32xf32, #tpu.memory_space<vmem>>, vector<32x32xf32>
    %c0_7 = arith.constant 0 : index
    %c0_8 = arith.constant 0 : index
    %18 = vector.load %arg5[%c0_7, %c0_8] : memref<32x1xf32, #tpu.memory_space<vmem>>, vector<32x1xf32>
    %cst = arith.constant dense<0.000000e+00> : vector<32x128xf32>
    %19 = tpu.matmul %17, %16, %cst {dimension_numbers = #tpu.dot_dimension_numbers<[1], [0], [0], [1], [0, 0, 1, 1], [], []>} : vector<32x32xf32>, vector<32x128xf32>, vector<32x128xf32> -> vector<32x128xf32>
    %20 = vector.broadcast %18 : vector<32x1xf32> to vector<32x128xf32>
    %21 = arith.addf %19, %20 : vector<32x128xf32>
    %22 = math.tanh %21 : vector<32x128xf32>
    %c0_9 = arith.constant 0 : index
    %c0_10 = arith.constant 0 : index
    %23 = vector.load %arg6[%c0_9, %c0_10] : memref<1x32xf32, #tpu.memory_space<vmem>>, vector<1x32xf32>
    %c0_11 = arith.constant 0 : index
    %c0_12 = arith.constant 0 : index
    %24 = vector.load %arg7[%c0_11, %c0_12] : memref<1x1xf32, #tpu.memory_space<vmem>>, vector<1x1xf32>
    %cst_13 = arith.constant dense<0.000000e+00> : vector<1x128xf32>
    %25 = tpu.matmul %23, %22, %cst_13 {dimension_numbers = #tpu.dot_dimension_numbers<[1], [0], [0], [1], [0, 0, 1, 1], [], []>} : vector<1x32xf32>, vector<32x128xf32>, vector<1x128xf32> -> vector<1x128xf32>
    %26 = vector.broadcast %24 : vector<1x1xf32> to vector<1x128xf32>
    %27 = arith.addf %25, %26 : vector<1x128xf32>
    %c0_14 = arith.constant 0 : index
    %c0_15 = arith.constant 0 : index
    %28 = vector.load %arg8[%c0_14, %c0_15] : memref<1x128xf32, #tpu.memory_space<vmem>>, vector<1x128xf32>
    tpu.vector_store %arg8[%c0_14, %c0_15], %27 {strides = array<i32>} : memref<1x128xf32, #tpu.memory_space<vmem>>, vector<1x128xf32>,
    return
  }
  func.func @transform_0(%arg0: i32) -> (i32, i32) {
    %c0_i32 = arith.constant 0 : i32
    %c0_i32_0 = arith.constant 0 : i32
    return %c0_i32, %arg0 : i32, i32
  }
  func.func @transform_1(%arg0: i32) -> (i32, i32) {
    %c0_i32 = arith.constant 0 : i32
    %c0_i32_0 = arith.constant 0 : i32
    %c0_i32_1 = arith.constant 0 : i32
    return %c0_i32, %c0_i32_0 : i32, i32
  }
  func.func @transform_2(%arg0: i32) -> (i32, i32) {
    %c0_i32 = arith.constant 0 : i32
    %c0_i32_0 = arith.constant 0 : i32
    %c0_i32_1 = arith.constant 0 : i32
    return %c0_i32, %c0_i32_0 : i32, i32
  }
  func.func @transform_3(%arg0: i32) -> (i32, i32) {
    %c0_i32 = arith.constant 0 : i32
    %c0_i32_0 = arith.constant 0 : i32
    %c0_i32_1 = arith.constant 0 : i32
    return %c0_i32, %c0_i32_0 : i32, i32
  }
  func.func @transform_4(%arg0: i32) -> (i32, i32) {
    %c0_i32 = arith.constant 0 : i32
    %c0_i32_0 = arith.constant 0 : i32
    %c0_i32_1 = arith.constant 0 : i32
    return %c0_i32, %c0_i32_0 : i32, i32
  }
  func.func @transform_5(%arg0: i32) -> (i32, i32) {
    %c0_i32 = arith.constant 0 : i32
    %c0_i32_0 = arith.constant 0 : i32
    %c0_i32_1 = arith.constant 0 : i32
    return %c0_i32, %c0_i32_0 : i32, i32
  }
  func.func @transform_6(%arg0: i32) -> (i32, i32) {
    %c0_i32 = arith.constant 0 : i32
    %c0_i32_0 = arith.constant 0 : i32
    %c0_i32_1 = arith.constant 0 : i32
    return %c0_i32, %c0_i32_0 : i32, i32
  }
  func.func @transform_7(%arg0: i32) -> (i32, i32) {
    %c0_i32 = arith.constant 0 : i32
    %c0_i32_0 = arith.constant 0 : i32
    return %c0_i32, %arg0 : i32, i32
  }
}

</mosaic_0001>

<llo_original>
// kernel: tpu_custom_call.1
$region0: #{tpu_custom_call.1}
  #allocation0 [shape = 'u32[]', space=smem, size = 0x4, offset = 0x4, fixed_abs, tag = 'smem constant byte address 0x4 - core index']
  #allocation1 [shape = 'u32[144,128]{1,0:T(1,128)}', space=vmem, size = 0x12000, scoped, tag = 'internal scratch']
  #allocation2 [shape = 'f32[1,1]{1,0:T(1,128)S(1)}', space=vmem, size = 0x200, scoped, tag = 'scoped memory for tpu_custom_call.1']
  %s0 = inlined_call_operand.vmem [shape: f32[2,128], index: 0, kind: input, shape index: {}]
  %s1 = inlined_call_operand.vmem [shape: f32[32,2], index: 1, kind: input, shape index: {}]
  %s2 = inlined_call_operand.vmem [shape: f32[32,1], index: 2, kind: input, shape index: {}]
  %s3 = inlined_call_operand.vmem [shape: f32[32,32], index: 3, kind: input, shape index: {}]
  %s4 = inlined_call_operand.vmem [shape: f32[32,1], index: 4, kind: input, shape index: {}]
  %s5 = inlined_call_operand.vmem [shape: f32[1,32], index: 5, kind: input, shape index: {}]
  %s6 = inlined_call_operand.<no memory space> [shape: f32[1,1], index: 6, kind: input, shape index: {}]
  %s7 = inlined_call_operand.hbm [shape: f32[1,128], index: 7, kind: output, shape index: {}]
  %s8 = sld [smem:[#allocation0]]
  $region38: #{tpu_custom_call.1} parent=0
    _
  %s10 = ssub.s32 1, %s8
  %s11 = scalar_select 0, %s10, %s8
  %v12 = vstv %s6
  %13 = vst [vmem:[#allocation2] sm:$0x1] %v12
  $region1: #{tpu_custom_call.1} parent=0
    #allocation3 [shape = 'u8[512]{0}', space=vmem, size = 0x400, scoped, tag = 'output window, operand 0, single buffered']
    #allocation4 [shape = 's32[1]{0}', space=sflag, size = 0x4, scoped, tag = 'scoped memory for tpu_custom_call.1']
    %14 = vsyncpa [#allocation4], 0
    // Predicated region
    $region2: #{tpu_custom_call.1} parent=1 // pred_check
      _
    $region3: #{tpu_custom_call.1} parent=1 // pred_check_branch
      %16 = sbr.rel (0) target = $region5
    $region4: #{tpu_custom_call.1} parent=1 // pred_region
      _
    $region5: #{tpu_custom_call.1} parent=1 // pred_fallthru
      _
    // Predicated region
    $region6: #{tpu_custom_call.1} parent=1 // pred_check
      _
    $region7: #{tpu_custom_call.1} parent=1 // pred_check_branch
      %18 = sbr.rel (0) target = $region9
    $region8: #{tpu_custom_call.1} parent=1 // pred_region
      _
    $region9: #{tpu_custom_call.1} parent=1 // pred_fallthru
      _
    // Predicated region
    $region10: #{tpu_custom_call.1} parent=1 // pred_check
      _
    $region11: #{tpu_custom_call.1} parent=1 // pred_check_branch
      %20 = sbr.rel (0) target = $region13
    $region12: #{tpu_custom_call.1} parent=1 // pred_region
      _
    $region13: #{tpu_custom_call.1} parent=1 // pred_fallthru
      _
    // Predicated region
    $region14: #{tpu_custom_call.1} parent=1 // pred_check
      _
    $region15: #{tpu_custom_call.1} parent=1 // pred_check_branch
      %22 = sbr.rel (0) target = $region17
    $region16: #{tpu_custom_call.1} parent=1 // pred_region
      _
    $region17: #{tpu_custom_call.1} parent=1 // pred_fallthru
      _
    // Predicated region
    $region18: #{tpu_custom_call.1} parent=1 // pred_check
      _
    $region19: #{tpu_custom_call.1} parent=1 // pred_check_branch
      %24 = sbr.rel (0) target = $region21
    $region20: #{tpu_custom_call.1} parent=1 // pred_region
      _
    $region21: #{tpu_custom_call.1} parent=1 // pred_fallthru
      _
    // Predicated region
    $region22: #{tpu_custom_call.1} parent=1 // pred_check
      _
    $region23: #{tpu_custom_call.1} parent=1 // pred_check_branch
      %26 = sbr.rel (0) target = $region25
    $region24: #{tpu_custom_call.1} parent=1 // pred_region
      _
    $region25: #{tpu_custom_call.1} parent=1 // pred_fallthru
      _
    // Predicated region
    $region26: #{tpu_custom_call.1} parent=1 // pred_check
      _
    $region27: #{tpu_custom_call.1} parent=1 // pred_check_branch
      %28 = sbr.rel (0) target = $region29
    $region28: #{tpu_custom_call.1} parent=1 // pred_region
      _
    $region29: #{tpu_custom_call.1} parent=1 // pred_fallthru
      _
    %v29 = vld [vmem:[%s0] sm:$0x3]
    %v30 = vld [vmem:[%s1] sm:$0xff]
    %v31 = vld [vmem:[%s1 + $0x8] sm:$0xff]
    %v32 = vld [vmem:[%s1 + $0x10] sm:$0xff]
    %v33 = vld [vmem:[%s1 + $0x18] sm:$0xff]
    %v34 = vld [vmem:[%s2] sm:$0xff]
    %v35 = vld [vmem:[%s2 + $0x8] sm:$0xff]
    %v36 = vld [vmem:[%s2 + $0x10] sm:$0xff]
    %v37 = vld [vmem:[%s2 + $0x18] sm:$0xff]
    %39 = vset.pattern.permute.xlu0 0
    %40 = vperm.xlu0 %39, %v30
    %v41 = vpop.permute.xlu0 %40
    %44 = vset.pattern.permute.xlu0 0
    %45 = vperm.xlu0 %44, %v31
    %v46 = vpop.permute.xlu0 %45
    %49 = vset.pattern.permute.xlu0 0
    %50 = vperm.xlu0 %49, %v32
    %v51 = vpop.permute.xlu0 %50
    %54 = vset.pattern.permute.xlu0 0
    %55 = vperm.xlu0 %54, %v33
    %v56 = vpop.permute.xlu0 %55
    %v58 = vlaneseq
    %v59 = vshrl.u32 %v58, 7
    %v60 = vsub.s32 0, %v59
    %v61 = vrot.slane %v29, %v60
    %v62 = vmul.f32 %v41, %v61
    %v63 = vmul.f32 %v46, %v61
    %v64 = vmul.f32 %v51, %v61
    %v65 = vmul.f32 %v56, %v61
    %67 = vset.pattern.permute.xlu0 0
    %68 = vperm.xlu0 %67, %v34
    %v69 = vpop.permute.xlu0 %68
    %72 = vset.pattern.permute.xlu0 0
    %73 = vperm.xlu0 %72, %v35
    %v74 = vpop.permute.xlu0 %73
    %77 = vset.pattern.permute.xlu0 0
    %78 = vperm.xlu0 %77, %v36
    %v79 = vpop.permute.xlu0 %78
    %82 = vset.pattern.permute.xlu0 0
    %83 = vperm.xlu0 %82, %v37
    %v84 = vpop.permute.xlu0 %83
    %v86 = vadd.f32 %v62, %v69
    %v87 = vadd.f32 %v63, %v74
    %v88 = vadd.f32 %v64, %v79
    %v89 = vadd.f32 %v65, %v84
    %90 = vset.pattern.permute.xlu0 1
    %91 = vperm.xlu0 %90, %v30
    %v92 = vpop.permute.xlu0 %91
    %94 = vset.pattern.permute.xlu0 1
    %95 = vperm.xlu0 %94, %v31
    %v96 = vpop.permute.xlu0 %95
    %98 = vset.pattern.permute.xlu0 1
    %99 = vperm.xlu0 %98, %v32
    %v100 = vpop.permute.xlu0 %99
    %102 = vset.pattern.permute.xlu0 1
    %103 = vperm.xlu0 %102, %v33
    %v104 = vpop.permute.xlu0 %103
    %v106 = vlaneseq
    %v107 = vshrl.u32 %v106, 7
    %v108 = vsub.s32 1, %v107
    %v109 = vrot.slane %v29, %v108
    %v110 = vmul.f32 %v92, %v109
    %v111 = vmul.f32 %v96, %v109
    %v112 = vmul.f32 %v100, %v109
    %v113 = vmul.f32 %v104, %v109
    %v114 = vadd.f32 %v86, %v110
    %v115 = vadd.f32 %v87, %v111
    %v116 = vadd.f32 %v88, %v112
    %v117 = vadd.f32 %v89, %v113
    %v118 = vtanh.pop %v114
    %v119 = vtanh.pop %v115
    %v120 = vtanh.pop %v116
    %v121 = vtanh.pop %v117
    %v122 = vld [vmem:[%s3] sm:$0xff]
    %v123 = vld [vmem:[%s3 + $0x8] sm:$0xff]
    %v124 = vld [vmem:[%s3 + $0x10] sm:$0xff]
    %v125 = vld [vmem:[%s3 + $0x18] sm:$0xff]
    %v126 = vld [vmem:[%s4] sm:$0xff]
    %v127 = vld [vmem:[%s4 + $0x8] sm:$0xff]
    %v128 = vld [vmem:[%s4 + $0x10] sm:$0xff]
    %v129 = vld [vmem:[%s4 + $0x18] sm:$0xff]
    %131 = vset.pattern.permute.xlu0 0
    %132 = vperm.xlu0 %131, %v126
    %v133 = vpop.permute.xlu0 %132
    %136 = vset.pattern.permute.xlu0 0
    %137 = vperm.xlu0 %136, %v127
    %v138 = vpop.permute.xlu0 %137
    %141 = vset.pattern.permute.xlu0 0
    %142 = vperm.xlu0 %141, %v128
    %v143 = vpop.permute.xlu0 %142
    %146 = vset.pattern.permute.xlu0 0
    %147 = vperm.xlu0 %146, %v129
    %v148 = vpop.permute.xlu0 %147
    %vm150 = vcmask 261120
    %v152 = vsel %vm150, %v122, 0
    %v155 = vsel %vm150, %v123, 0
    %v158 = vsel %vm150, %v124, 0
    %v161 = vsel %vm150, %v125, 0
    %163 = vmatprep.subr.mxu0 0.0
    %164 = vmatpush1.msra.mxu0 %v118
    %165 = vmatprep.subr.mxu0 0.0
    %166 = vmatpush1.msra.mxu0 %v119
    %167 = vmatprep.subr.mxu0 0.0
    %168 = vmatpush1.msra.mxu0 %v120
    %169 = vmatprep.subr.mxu0 0.0
    %170 = vmatpush1.msra.mxu0 %v121
    %171 = vmatprep.subr.mxu0 0.0
    %172 = vmatpush1.msra.mxu0 0.0
    %173 = vmatprep.subr.mxu0 0.0
    %174 = vmatpush1.msra.mxu0 0.0
    %175 = vmatprep.subr.mxu0 0.0
    %176 = vmatpush1.msra.mxu0 0.0
    %177 = vmatprep.subr.mxu0 0.0
    %178 = vmatpush1.msra.mxu0 0.0
    %179 = vmatprep.subr.mxu0 0.0
    %180 = vmatpush1.msra.mxu0 0.0
    %181 = vmatprep.subr.mxu0 0.0
    %182 = vmatpush1.msra.mxu0 0.0
    %183 = vmatprep.subr.mxu0 0.0
    %184 = vmatpush1.msra.mxu0 0.0
    %185 = vmatprep.subr.mxu0 0.0
    %186 = vmatpush1.msra.mxu0 0.0
    %187 = vmatprep.subr.mxu0 0.0
    %188 = vmatpush1.msra.mxu0 0.0
    %189 = vmatprep.subr.mxu0 0.0
    %190 = vmatpush1.msra.mxu0 0.0
    %191 = vmatprep.subr.mxu0 0.0
    %192 = vmatpush1.msra.mxu0 0.0
    %193 = vmatprep.subr.mxu0 0.0
    %194 = vmatpush1.msra.mxu0 0.0
    %195 = vmatprep.subr.mxu0 0.0
    %196 = vmatpush1.msra.mxu0 0.0
    %197 = vmatprep.subr.mxu0 0.0
    %198 = vmatpush1.msra.mxu0 0.0
    %199 = vmatprep.subr.mxu0 0.0
    %200 = vmatpush1.msra.mxu0 0.0
    %201 = vmatprep.subr.mxu0 0.0
    %202 = vmatpush1.msra.mxu0 0.0
    %203 = vmatprep.subr.mxu0 0.0
    %204 = vmatpush1.msra.mxu0 0.0
    %205 = vmatprep.subr.mxu0 0.0
    %206 = vmatpush1.msra.mxu0 0.0
    %207 = vmatprep.subr.mxu0 0.0
    %208 = vmatpush1.msra.mxu0 0.0
    %209 = vmatprep.subr.mxu0 0.0
    %210 = vmatpush1.msra.mxu0 0.0
    %211 = vmatprep.subr.mxu0 0.0
    %212 = vmatpush1.msra.mxu0 0.0
    %213 = vmatprep.subr.mxu0 0.0
    %214 = vmatpush1.msra.mxu0 0.0
    %215 = vmatprep.subr.mxu0 0.0
    %216 = vmatpush1.msra.mxu0 0.0
    %217 = vmatprep.subr.mxu0 0.0
    %218 = vmatpush1.msra.mxu0 0.0
    %219 = vmatprep.subr.mxu0 0.0
    %220 = vmatpush1.msra.mxu0 0.0
    %221 = vmatprep.subr.mxu0 0.0
    %222 = vmatpush1.msra.mxu0 0.0
    %223 = vmatprep.subr.mxu0 0.0
    %224 = vmatpush1.msra.mxu0 0.0
    %225 = vmatprep.subr.mxu0 0.0
    %226 = vmatpush1.msra.mxu0 0.0
    %227 = vmatprep.mubr.f32.mxu0 0.0
    %228 = vmatmul.mubr.f32.gmra.mrb[0].mxu0 %v152
    %v229 = vpop.f32.mrb[0].mxu0
    %v230 = vadd.f32 %v133, %v229
    %v231 = vpop.f32.mrb[0].mxu0
    %232 = vmatprep.mubr.f32.mxu0 0.0
    %233 = vmatmul.mubr.f32.gmra.mrb[0].mxu0 %v155
    %v234 = vpop.f32.mrb[0].mxu0
    %v235 = vadd.f32 %v138, %v234
    %v236 = vpop.f32.mrb[0].mxu0
    %237 = vmatprep.mubr.f32.mxu0 0.0
    %238 = vmatmul.mubr.f32.gmra.mrb[0].mxu0 %v158
    %v239 = vpop.f32.mrb[0].mxu0
    %v240 = vadd.f32 %v143, %v239
    %v241 = vpop.f32.mrb[0].mxu0
    %242 = vmatprep.mubr.f32.mxu0 0.0
    %243 = vmatmul.mubr.f32.gmra.mrb[0].mxu0 %v161
    %v244 = vpop.f32.mrb[0].mxu0
    %v245 = vadd.f32 %v148, %v244
    %v246 = vpop.f32.mrb[0].mxu0
    %247 = vdwg.mxu0
    %v248 = vtanh.pop %v230
    %v249 = vtanh.pop %v235
    %v250 = vtanh.pop %v240
    %v251 = vtanh.pop %v245
    %v252 = vld [vmem:[%s5] sm:$0x1]
    %v253 = vld [vmem:[#allocation2] sm:$0x1]
    %255 = vset.pattern.permute.xlu0 0
    %256 = vperm.xlu0 %255, %v253
    %v257 = vpop.permute.xlu0 %256
    %v259 = vlaneseq
    %v260 = vshrl.u32 %v259, 7
    %v261 = vsub.s32 0, %v260
    %v262 = vrot.slane %v257, %v261
    %v264 = vsel %vm150, %v252, 0
    %266 = vmatprep.subr.mxu0 0.0
    %267 = vmatpush1.msra.mxu0 %v248
    %268 = vmatprep.subr.mxu0 0.0
    %269 = vmatpush1.msra.mxu0 %v249
    %270 = vmatprep.subr.mxu0 0.0
    %271 = vmatpush1.msra.mxu0 %v250
    %272 = vmatprep.subr.mxu0 0.0
    %273 = vmatpush1.msra.mxu0 %v251
    %274 = vmatprep.subr.mxu0 0.0
    %275 = vmatpush1.msra.mxu0 0.0
    %276 = vmatprep.subr.mxu0 0.0
    %277 = vmatpush1.msra.mxu0 0.0
    %278 = vmatprep.subr.mxu0 0.0
    %279 = vmatpush1.msra.mxu0 0.0
    %280 = vmatprep.subr.mxu0 0.0
    %281 = vmatpush1.msra.mxu0 0.0
    %282 = vmatprep.subr.mxu0 0.0
    %283 = vmatpush1.msra.mxu0 0.0
    %284 = vmatprep.subr.mxu0 0.0
    %285 = vmatpush1.msra.mxu0 0.0
    %286 = vmatprep.subr.mxu0 0.0
    %287 = vmatpush1.msra.mxu0 0.0
    %288 = vmatprep.subr.mxu0 0.0
    %289 = vmatpush1.msra.mxu0 0.0
    %290 = vmatprep.subr.mxu0 0.0
    %291 = vmatpush1.msra.mxu0 0.0
    %292 = vmatprep.subr.mxu0 0.0
    %293 = vmatpush1.msra.mxu0 0.0
    %294 = vmatprep.subr.mxu0 0.0
    %295 = vmatpush1.msra.mxu0 0.0
    %296 = vmatprep.subr.mxu0 0.0
    %297 = vmatpush1.msra.mxu0 0.0
    %298 = vmatprep.subr.mxu0 0.0
    %299 = vmatpush1.msra.mxu0 0.0
    %300 = vmatprep.subr.mxu0 0.0
    %301 = vmatpush1.msra.mxu0 0.0
    %302 = vmatprep.subr.mxu0 0.0
    %303 = vmatpush1.msra.mxu0 0.0
    %304 = vmatprep.subr.mxu0 0.0
    %305 = vmatpush1.msra.mxu0 0.0
    %306 = vmatprep.subr.mxu0 0.0
    %307 = vmatpush1.msra.mxu0 0.0
    %308 = vmatprep.subr.mxu0 0.0
    %309 = vmatpush1.msra.mxu0 0.0
    %310 = vmatprep.subr.mxu0 0.0
    %311 = vmatpush1.msra.mxu0 0.0
    %312 = vmatprep.subr.mxu0 0.0
    %313 = vmatpush1.msra.mxu0 0.0
    %314 = vmatprep.subr.mxu0 0.0
    %315 = vmatpush1.msra.mxu0 0.0
    %316 = vmatprep.subr.mxu0 0.0
    %317 = vmatpush1.msra.mxu0 0.0
    %318 = vmatprep.subr.mxu0 0.0
    %319 = vmatpush1.msra.mxu0 0.0
    %320 = vmatprep.subr.mxu0 0.0
    %321 = vmatpush1.msra.mxu0 0.0
    %322 = vmatprep.subr.mxu0 0.0
    %323 = vmatpush1.msra.mxu0 0.0
    %324 = vmatprep.subr.mxu0 0.0
    %325 = vmatpush1.msra.mxu0 0.0
    %326 = vmatprep.subr.mxu0 0.0
    %327 = vmatpush1.msra.mxu0 0.0
    %328 = vmatprep.subr.mxu0 0.0
    %329 = vmatpush1.msra.mxu0 0.0
    %330 = vmatprep.mubr.f32.mxu0 0.0
    %331 = vmatmul.mubr.f32.gmra.mrb[0].mxu0 %v264
    %v332 = vpop.f32.mrb[0].mxu0
    %v333 = vadd.f32 %v262, %v332
    %v334 = vpop.f32.mrb[0].mxu0
    %335 = vdwg.mxu0
    %336 = vst [vmem:[#allocation3] sm:$0x1] %v333
    // Predicated region
    $region30: #{tpu_custom_call.1} parent=1 // pred_check
      _
    $region31: #{tpu_custom_call.1} parent=1 // pred_check_branch
      %338 = sbr.rel (0) target = $region33
    $region32: #{tpu_custom_call.1} parent=1 // pred_region
      %s340 = ssub.s32 16, 16
      %341 = vsyncadd [#allocation4], %s340
      %s343 = sshll.u32 [#allocation3], 4
      %s344 = int_to_ptr.vmem [resolvable:$true] %s343
      %346 = dma.vmem_to_hbm [thread:$0]  %s344, 16, %s7, [#allocation4]
    $region33: #{tpu_custom_call.1} parent=1 // pred_fallthru
      _
    // Predicated region
    $region34: #{tpu_custom_call.1} parent=1 // pred_check
      _
    $region35: #{tpu_custom_call.1} parent=1 // pred_check_branch
      %348 = sbr.rel (0) target = $region37
    $region36: #{tpu_custom_call.1} parent=1 // pred_region
      %349 = dma.done [#allocation4], 16
    $region37: #{tpu_custom_call.1} parent=1 // pred_fallthru
      _
    %350 = vsyncpa [#allocation4], 1

</llo_original>
